<compile_context>
chip_gen: v7x
topology: tpu7x:2x2x1
jax: 0.10.0
libtpu: 0.0.40
codegen_flags: <defaults>
</compile_context>

<pallas_src>
import functools
import math

import jax
import jax.numpy as jnp
from jax.experimental import pallas as pl
from jax.experimental.pallas import tpu as pltpu


# --------------------------------------------------------------------------------------
# Phase 1: fused full-width Q/K/V projections (weights resident in VMEM)
# --------------------------------------------------------------------------------------
def _qkv_projection_kernel(q_ref, k_ref, v_ref,
                           wq_ref, bq_ref, wk_ref, bk_ref, wv_ref, bv_ref,
                           qp_ref, kp_ref, vp_ref):
    # activations: (TS, d_model) in compute dtype; weights: (d_model, d_model) resident
    qp_ref[...] = (jnp.dot(q_ref[...], wq_ref[...],
                           preferred_element_type=jnp.float32) + bq_ref[...]
                   ).astype(qp_ref.dtype)
    kp_ref[...] = (jnp.dot(k_ref[...], wk_ref[...],
                           preferred_element_type=jnp.float32) + bk_ref[...]
                   ).astype(kp_ref.dtype)
    vp_ref[...] = (jnp.dot(v_ref[...], wv_ref[...],
                           preferred_element_type=jnp.float32) + bv_ref[...]
                   ).astype(vp_ref.dtype)


# --------------------------------------------------------------------------------------
# Phase 2: per (batch, q_tile, head_group) attention; single output projection at the
#          last head group against a resident Wo.
# --------------------------------------------------------------------------------------
def _attention_kernel(q_ref, k_ref, v_ref, mask_ref, wo_ref, bo_ref, *refs,
                      heads_per_group, num_groups, d_k, kv_resident, write_attn):
    if write_attn:
        out_ref, attn_ref, ctx_ref = refs
    else:
        out_ref, ctx_ref = refs
        attn_ref = None

    g = pl.program_id(2)
    gdk = heads_per_group * d_k
    cdt = q_ref.dtype

    # 0 == masked position (torch.masked_fill semantics; exact where/select kept so
    # fully-masked rows degrade to uniform attention like the reference).
    masked = mask_ref[...].astype(jnp.int32) == 0                     # (TQ, seq)

    # Column base of this head group inside the ctx scratch / full-width K, V.
    if num_groups == 1:
        ctx_base = 0
    else:
        ctx_base = pl.multiple_of(g * gdk, gdk)
    kv_base = ctx_base if kv_resident else 0

    for hh in range(heads_per_group):
        q_h = q_ref[:, pl.ds(hh * d_k, d_k)]                          # (TQ, d_k)
        k_h = k_ref[:, pl.ds(kv_base + hh * d_k, d_k)]                # (seq, d_k)
        v_h = v_ref[:, pl.ds(kv_base + hh * d_k, d_k)]                # (seq, d_k)

        # scores = q @ k^T  (1/sqrt(d_k) already folded into the Q projection)
        s = jax.lax.dot_general(q_h, k_h,
                                dimension_numbers=(((1,), (1,)), ((), ())),
                                preferred_element_type=jnp.float32)   # (TQ, seq)
        s = jnp.where(masked, jnp.float32(-1e9), s)

        # softmax over keys with f32 statistics
        m = jnp.max(s, axis=-1, keepdims=True)
        e = jnp.exp(s - m)
        p = e * pl.reciprocal(jnp.sum(e, axis=-1, keepdims=True), approx=False)

        if write_attn:
            attn_ref[hh] = p.astype(attn_ref.dtype)

        ctx_h = jnp.dot(p.astype(cdt), v_h,
                        preferred_element_type=jnp.float32)           # (TQ, d_k)
        ctx_ref[:, pl.ds(ctx_base + hh * d_k, d_k)] = ctx_h

    @pl.when(g == pl.num_programs(2) - 1)
    def _():
        # Single wide output projection: (TQ, d_model) @ (d_model, d_model)
        ctx = ctx_ref[...].astype(cdt)
        out = jnp.dot(ctx, wo_ref[...],
                      preferred_element_type=jnp.float32) + bo_ref[...]
        out_ref[...] = out.astype(out_ref.dtype)


# --------------------------------------------------------------------------------------
# VMEM-aware sizing helpers
# --------------------------------------------------------------------------------------
def _vmem_budget_bytes():
    """~75% of physical VMEM (v5e/v6e: 128 MiB -> 96 MiB, v7x: 64 MiB -> 48 MiB)."""
    phys = 64 * 1024 * 1024
    try:
        info = pltpu.get_tpu_info()
        phys = int(getattr(info, "vmem_capacity_bytes", phys) or phys)
    except Exception:
        pass
    return int(phys * 0.75)


def _pick_tile(seq, footprint_bytes, budget):
    candidates = [t for t in (1024, 512, 256, 128, 64, 32, 16, 8)
                  if t <= seq and seq % t == 0]
    if not candidates:
        candidates = [seq]
    for t in candidates:
        if footprint_bytes(t) <= budget:
            return t
    return candidates[-1]


# --------------------------------------------------------------------------------------
# Wrapper
# --------------------------------------------------------------------------------------
def masked_multi_head_attention(Q, K, V, mask, params, num_heads, *,
                                compute_dtype=jnp.bfloat16,
                                attn_dtype=jnp.float32,
                                return_attn=True):
    """Q, K, V: (batch, seq, d_model) f32; mask: (batch, seq, seq), 0 = masked.

    Returns (out, attn) like the PyTorch module (attn only if return_attn=True).
    compute_dtype=bf16 (default) uses the native MXU path with f32 accumulation;
    pass jnp.float32 for tight parity with the f32 reference.
    """
    batch, seq, d_model = Q.shape
    assert d_model % num_heads == 0, "d_model must be divisible by num_heads"
    d_k = d_model // num_heads
    scale = 1.0 / math.sqrt(d_k)
    cdt = jnp.dtype(compute_dtype)
    cb = cdt.itemsize
    ab = jnp.dtype(attn_dtype).itemsize

    # Head grouping so streamed last dims are lane-dense (>=128 lanes where possible).
    g_heads = min(num_heads, max(1, 128 // d_k))
    while num_heads % g_heads != 0:
        g_heads -= 1
    n_groups = num_heads // g_heads
    gdk = g_heads * d_k

    budget = _vmem_budget_bytes()

    # PyTorch Linear stores (out_features, in_features): y = x @ W^T + b.
    # Fold the 1/sqrt(d_k) attention scale into the Q projection (one-time transform).
    wq_t = (params["wq"].T * scale).astype(cdt)
    wk_t = params["wk"].T.astype(cdt)
    wv_t = params["wv"].T.astype(cdt)
    wo_t = params["wo"].T.astype(cdt)
    bq = (params["bq"] * scale).reshape(1, d_model).astype(jnp.float32)
    bk = params["bk"].reshape(1, d_model).astype(jnp.float32)
    bv = params["bv"].reshape(1, d_model).astype(jnp.float32)
    bo = params["bo"].reshape(1, d_model).astype(jnp.float32)

    Qc, Kc, Vc = Q.astype(cdt), K.astype(cdt), V.astype(cdt)
    mask_i8 = (mask != 0).astype(jnp.int8)       # 4x less HBM traffic than an f32 mask

    def p2_footprint(tq):
        stream = 2 * (tq * gdk * cb                         # q block
                      + 2 * seq * gdk * cb                  # k + v blocks
                      + tq * seq                            # int8 mask
                      + (g_heads * tq * seq * ab if return_attn else 0)
                      + tq * d_model * 4)                   # out block
        resident = (d_model * d_model + d_model) * cb + tq * d_model * 4   # Wo, bo, ctx
        interm = 6 * tq * seq * 4                           # scores/exp/probs headroom
        return stream + resident + interm

    tile = _pick_tile(seq, p2_footprint, budget)
    n_tiles = seq // tile

    # Hold the full per-batch K/V resident across q tiles when VMEM allows
    # (removes the n_tiles-fold K/V re-fetch across the inner head-group axis).
    kv_resident = (n_tiles > 1 and
                   p2_footprint(tile) + 4 * seq * d_model * cb <= budget)

    vmem_limit = budget

    # ---------------- Phase 1: Q/K/V projections, resident weights --------------------
    act_spec = pl.BlockSpec((None, tile, d_model), lambda b, s: (b, s, 0))
    w_spec = pl.BlockSpec((d_model, d_model), lambda b, s: (0, 0))       # resident
    b_spec = pl.BlockSpec((1, d_model), lambda b, s: (0, 0))
    proj_spec = pl.BlockSpec((None, tile, d_model), lambda b, s: (b, s, 0))
    proj_shape = jax.ShapeDtypeStruct((batch, seq, d_model), cdt)
    # TODO(synk): for very large d_model the resident (d_model, d_model) weights may not
    # fit the VMEM budget; that regime would need K-tiling of the projection weights.

    qp, kp, vp = pl.pallas_call(
        _qkv_projection_kernel,
        out_shape=(proj_shape, proj_shape, proj_shape),
        grid_spec=pltpu.PrefetchScalarGridSpec(
            num_scalar_prefetch=0,
            grid=(batch, n_tiles),
            in_specs=[act_spec, act_spec, act_spec,
                      w_spec, b_spec, w_spec, b_spec, w_spec, b_spec],
            out_specs=(proj_spec, proj_spec, proj_spec),
        ),
        compiler_params=pltpu.CompilerParams(
            dimension_semantics=("parallel", "parallel"),
            vmem_limit_bytes=vmem_limit,
        ),
    )(Qc, Kc, Vc, wq_t, bq, wk_t, bk, wv_t, bv)

    # ---------------- Phase 2: attention + single output projection -------------------
    q_blk = pl.BlockSpec((None, tile, gdk), lambda b, qi, g: (b, qi, g))
    if kv_resident:
        kv_blk = pl.BlockSpec((None, seq, d_model), lambda b, qi, g: (b, 0, 0))
    else:
        kv_blk = pl.BlockSpec((None, seq, gdk), lambda b, qi, g: (b, 0, g))
    mask_blk = pl.BlockSpec((None, tile, seq), lambda b, qi, g: (b, qi, 0))
    wo_blk = pl.BlockSpec((d_model, d_model), lambda b, qi, g: (0, 0))   # resident
    bo_blk = pl.BlockSpec((1, d_model), lambda b, qi, g: (0, 0))
    out_blk = pl.BlockSpec((None, tile, d_model), lambda b, qi, g: (b, qi, 0))

    out_shapes = [jax.ShapeDtypeStruct((batch, seq, d_model), jnp.float32)]
    out_specs = [out_blk]
    if return_attn:
        out_shapes.append(jax.ShapeDtypeStruct((batch, num_heads, seq, seq), attn_dtype))
        out_specs.append(
            pl.BlockSpec((None, g_heads, tile, seq), lambda b, qi, g: (b, g, qi, 0)))

    kernel = functools.partial(
        _attention_kernel,
        heads_per_group=g_heads, num_groups=n_groups, d_k=d_k,
        kv_resident=kv_resident, write_attn=return_attn)

    results = pl.pallas_call(
        kernel,
        out_shape=tuple(out_shapes),
        grid_spec=pltpu.PrefetchScalarGridSpec(
            num_scalar_prefetch=0,
            grid=(batch, n_tiles, n_groups),    # head-group innermost: out accumulates
            in_specs=[q_blk, kv_blk, kv_blk, mask_blk, wo_blk, bo_blk],
            out_specs=tuple(out_specs),
            scratch_shapes=[pltpu.VMEM((tile, d_model), jnp.float32)],
        ),
        compiler_params=pltpu.CompilerParams(
            dimension_semantics=("parallel", "parallel", "arbitrary"),
            vmem_limit_bytes=vmem_limit,
        ),
    )(qp, kp, vp, mask_i8, wo_t, bo)

    if return_attn:
        out, attn = results
        return out, attn
    return results[0]


# --------------------------------------------------------------------------------------
# Pure-JAX reference mirroring the PyTorch module semantics
# --------------------------------------------------------------------------------------
def reference_mha(Q, K, V, mask, params, num_heads):
    batch, seq, d_model = Q.shape
    d_k = d_model // num_heads

    def lin(x, w, b):
        return x @ w.T + b

    q = lin(Q, params["wq"], params["bq"]).reshape(batch, seq, num_heads, d_k).transpose(0, 2, 1, 3)
    k = lin(K, params["wk"], params["bk"]).reshape(batch, seq, num_heads, d_k).transpose(0, 2, 1, 3)
    v = lin(V, params["wv"], params["bv"]).reshape(batch, seq, num_heads, d_k).transpose(0, 2, 1, 3)

    scores = jnp.einsum("bhqd,bhkd->bhqk", q, k) / math.sqrt(d_k)
    scores = jnp.where(mask[:, None, :, :] == 0, -1e9, scores)
    attn = jax.nn.softmax(scores, axis=-1)
    ctx = jnp.einsum("bhqk,bhkd->bhqd", attn, v)
    concat = ctx.transpose(0, 2, 1, 3).reshape(batch, seq, d_model)
    out = lin(concat, params["wo"], params["bo"])
    return out, attn


if __name__ == "__main__":
    batch, seq, d_model, num_heads = 2, 8, 32, 4

    key = jax.random.PRNGKey(0)
    keys = jax.random.split(key, 12)

    # PyTorch-style (out_features, in_features) weights.
    def winit(k):
        lim = 1.0 / math.sqrt(d_model)
        return jax.random.uniform(k, (d_model, d_model), jnp.float32, -lim, lim)

    def binit(k):
        lim = 1.0 / math.sqrt(d_model)
        return jax.random.uniform(k, (d_model,), jnp.float32, -lim, lim)

    params = {
        "wq": winit(keys[0]), "bq": binit(keys[1]),
        "wk": winit(keys[2]), "bk": binit(keys[3]),
        "wv": winit(keys[4]), "bv": binit(keys[5]),
        "wo": winit(keys[6]), "bo": binit(keys[7]),
    }

    Q = jax.random.normal(keys[8], (batch, seq, d_model), jnp.float32)
    K = jax.random.normal(keys[9], (batch, seq, d_model), jnp.float32)
    V = jax.random.normal(keys[10], (batch, seq, d_model), jnp.float32)

    # Causal (decoder) mask: 1 = attend, 0 = masked.
    causal = jnp.tril(jnp.ones((seq, seq), jnp.float32))
    mask = jnp.broadcast_to(causal, (batch, seq, seq))

    out_ref, attn_ref = reference_mha(Q, K, V, mask, params, num_heads)

    # Exact f32 MXU path: tight tolerance against the f32 reference.
    out32, attn32 = masked_multi_head_attention(
        Q, K, V, mask, params, num_heads, compute_dtype=jnp.float32)
    jax.block_until_ready((out32, attn32))
    assert jnp.allclose(out32, out_ref, atol=1e-4, rtol=1e-4), "f32 output mismatch"
    assert jnp.allclose(attn32, attn_ref, atol=1e-5, rtol=1e-5), "f32 attn mismatch"

    # Default bf16 MXU path (native MXU throughput, f32 accumulation): looser tolerance.
    out_bf, attn_bf = masked_multi_head_attention(Q, K, V, mask, params, num_heads)
    jax.block_until_ready((out_bf, attn_bf))
    assert jnp.allclose(out_bf, out_ref, atol=5e-2, rtol=5e-2), "bf16 output mismatch"
    assert jnp.allclose(attn_bf, attn_ref, atol=3e-2, rtol=3e-2), "bf16 attn mismatch"

    # TODO(synk): the PyTorch mask=None path is not exposed; callers must pass an
    # all-ones mask for the unmasked case.
    print("KERNEL_OK")
</pallas_src>

<mosaic_0001>
module attributes {stable_mosaic.version = 11 : i64} {
  func.func @_qkv_projection_kernel(%arg0: i32, %arg1: i32, %arg2: memref<1x8x32xf32, #tpu.memory_space<vmem>>, %arg3: memref<1x8x32xf32, #tpu.memory_space<vmem>>, %arg4: memref<1x8x32xf32, #tpu.memory_space<vmem>>, %arg5: memref<32x32xf32, #tpu.memory_space<vmem>>, %arg6: memref<1x32xf32, #tpu.memory_space<vmem>>, %arg7: memref<32x32xf32, #tpu.memory_space<vmem>>, %arg8: memref<1x32xf32, #tpu.memory_space<vmem>>, %arg9: memref<32x32xf32, #tpu.memory_space<vmem>>, %arg10: memref<1x32xf32, #tpu.memory_space<vmem>>, %arg11: memref<1x8x32xf32, #tpu.memory_space<vmem>>, %arg12: memref<1x8x32xf32, #tpu.memory_space<vmem>>, %arg13: memref<1x8x32xf32, #tpu.memory_space<vmem>>) attributes {dimension_semantics = [#tpu.dimension_semantics<parallel>, #tpu.dimension_semantics<parallel>], iteration_bounds = array<i64: 2, 1>, scalar_prefetch = 0 : i64, scratch_operands = 0 : i64, tpu.core_type = #tpu.core_type<tc>, window_params = [{transform_indices = @transform_0, window_bounds = array<i64: 1, 8, 32>}, {transform_indices = @transform_1, window_bounds = array<i64: 1, 8, 32>}, {transform_indices = @transform_2, window_bounds = array<i64: 1, 8, 32>}, {pipeline_mode = #tpu.pipeline_mode<synchronous>, transform_indices = @transform_3, window_bounds = array<i64: 32, 32>}, {pipeline_mode = #tpu.pipeline_mode<synchronous>, transform_indices = @transform_4, window_bounds = array<i64: 1, 32>}, {pipeline_mode = #tpu.pipeline_mode<synchronous>, transform_indices = @transform_5, window_bounds = array<i64: 32, 32>}, {pipeline_mode = #tpu.pipeline_mode<synchronous>, transform_indices = @transform_6, window_bounds = array<i64: 1, 32>}, {pipeline_mode = #tpu.pipeline_mode<synchronous>, transform_indices = @transform_7, window_bounds = array<i64: 32, 32>}, {pipeline_mode = #tpu.pipeline_mode<synchronous>, transform_indices = @transform_8, window_bounds = array<i64: 1, 32>}, {transform_indices = @transform_9, window_bounds = array<i64: 1, 8, 32>}, {transform_indices = @transform_10, window_bounds = array<i64: 1, 8, 32>}, {transform_indices = @transform_11, window_bounds = array<i64: 1, 8, 32>}]} {
    %c0 = arith.constant 0 : index
    %c0_0 = arith.constant 0 : index
    %c0_1 = arith.constant 0 : index
    %0 = vector.load %arg2[%c0, %c0_0, %c0_1] : memref<1x8x32xf32, #tpu.memory_space<vmem>>, vector<1x8x32xf32>
    %1 = vector.shape_cast %0 : vector<1x8x32xf32> to vector<8x32xf32>
    %c0_2 = arith.constant 0 : index
    %c0_3 = arith.constant 0 : index
    %2 = vector.load %arg5[%c0_2, %c0_3] : memref<32x32xf32, #tpu.memory_space<vmem>>, vector<32x32xf32>
    %cst = arith.constant dense<0.000000e+00> : vector<8x32xf32>
    %3 = tpu.matmul %1, %2, %cst {dimension_numbers = #tpu.dot_dimension_numbers<[1], [0], [0], [1], [0, 0, 1, 1], [], []>} : vector<8x32xf32>, vector<32x32xf32>, vector<8x32xf32> -> vector<8x32xf32>
    %c0_4 = arith.constant 0 : index
    %c0_5 = arith.constant 0 : index
    %4 = vector.load %arg6[%c0_4, %c0_5] : memref<1x32xf32, #tpu.memory_space<vmem>>, vector<1x32xf32>
    %5 = vector.broadcast %4 : vector<1x32xf32> to vector<8x32xf32>
    %6 = arith.addf %3, %5 : vector<8x32xf32>
    %c0_6 = arith.constant 0 : index
    %c0_7 = arith.constant 0 : index
    %c0_8 = arith.constant 0 : index
    %7 = vector.load %arg11[%c0_6, %c0_7, %c0_8] : memref<1x8x32xf32, #tpu.memory_space<vmem>>, vector<1x8x32xf32>
    %8 = vector.shape_cast %7 : vector<1x8x32xf32> to vector<8x32xf32>
    %9 = vector.shape_cast %6 : vector<8x32xf32> to vector<1x8x32xf32>
    tpu.vector_store %arg11[%c0_6, %c0_7, %c0_8], %9 {strides = array<i32>} : memref<1x8x32xf32, #tpu.memory_space<vmem>>, vector<1x8x32xf32>,
    %c0_9 = arith.constant 0 : index
    %c0_10 = arith.constant 0 : index
    %c0_11 = arith.constant 0 : index
    %10 = vector.load %arg3[%c0_9, %c0_10, %c0_11] : memref<1x8x32xf32, #tpu.memory_space<vmem>>, vector<1x8x32xf32>
    %11 = vector.shape_cast %10 : vector<1x8x32xf32> to vector<8x32xf32>
    %c0_12 = arith.constant 0 : index
    %c0_13 = arith.constant 0 : index
    %12 = vector.load %arg7[%c0_12, %c0_13] : memref<32x32xf32, #tpu.memory_space<vmem>>, vector<32x32xf32>
    %cst_14 = arith.constant dense<0.000000e+00> : vector<8x32xf32>
    %13 = tpu.matmul %11, %12, %cst_14 {dimension_numbers = #tpu.dot_dimension_numbers<[1], [0], [0], [1], [0, 0, 1, 1], [], []>} : vector<8x32xf32>, vector<32x32xf32>, vector<8x32xf32> -> vector<8x32xf32>
    %c0_15 = arith.constant 0 : index
    %c0_16 = arith.constant 0 : index
    %14 = vector.load %arg8[%c0_15, %c0_16] : memref<1x32xf32, #tpu.memory_space<vmem>>, vector<1x32xf32>
    %15 = vector.broadcast %14 : vector<1x32xf32> to vector<8x32xf32>
    %16 = arith.addf %13, %15 : vector<8x32xf32>
    %c0_17 = arith.constant 0 : index
    %c0_18 = arith.constant 0 : index
    %c0_19 = arith.constant 0 : index
    %17 = vector.load %arg12[%c0_17, %c0_18, %c0_19] : memref<1x8x32xf32, #tpu.memory_space<vmem>>, vector<1x8x32xf32>
    %18 = vector.shape_cast %17 : vector<1x8x32xf32> to vector<8x32xf32>
    %19 = vector.shape_cast %16 : vector<8x32xf32> to vector<1x8x32xf32>
    tpu.vector_store %arg12[%c0_17, %c0_18, %c0_19], %19 {strides = array<i32>} : memref<1x8x32xf32, #tpu.memory_space<vmem>>, vector<1x8x32xf32>,
    %c0_20 = arith.constant 0 : index
    %c0_21 = arith.constant 0 : index
    %c0_22 = arith.constant 0 : index
    %20 = vector.load %arg4[%c0_20, %c0_21, %c0_22] : memref<1x8x32xf32, #tpu.memory_space<vmem>>, vector<1x8x32xf32>
    %21 = vector.shape_cast %20 : vector<1x8x32xf32> to vector<8x32xf32>
    %c0_23 = arith.constant 0 : index
    %c0_24 = arith.constant 0 : index
    %22 = vector.load %arg9[%c0_23, %c0_24] : memref<32x32xf32, #tpu.memory_space<vmem>>, vector<32x32xf32>
    %cst_25 = arith.constant dense<0.000000e+00> : vector<8x32xf32>
    %23 = tpu.matmul %21, %22, %cst_25 {dimension_numbers = #tpu.dot_dimension_numbers<[1], [0], [0], [1], [0, 0, 1, 1], [], []>} : vector<8x32xf32>, vector<32x32xf32>, vector<8x32xf32> -> vector<8x32xf32>
    %c0_26 = arith.constant 0 : index
    %c0_27 = arith.constant 0 : index
    %24 = vector.load %arg10[%c0_26, %c0_27] : memref<1x32xf32, #tpu.memory_space<vmem>>, vector<1x32xf32>
    %25 = vector.broadcast %24 : vector<1x32xf32> to vector<8x32xf32>
    %26 = arith.addf %23, %25 : vector<8x32xf32>
    %c0_28 = arith.constant 0 : index
    %c0_29 = arith.constant 0 : index
    %c0_30 = arith.constant 0 : index
    %27 = vector.load %arg13[%c0_28, %c0_29, %c0_30] : memref<1x8x32xf32, #tpu.memory_space<vmem>>, vector<1x8x32xf32>
    %28 = vector.shape_cast %27 : vector<1x8x32xf32> to vector<8x32xf32>
    %29 = vector.shape_cast %26 : vector<8x32xf32> to vector<1x8x32xf32>
    tpu.vector_store %arg13[%c0_28, %c0_29, %c0_30], %29 {strides = array<i32>} : memref<1x8x32xf32, #tpu.memory_space<vmem>>, vector<1x8x32xf32>,
    return
  }
  func.func @transform_0(%arg0: i32, %arg1: i32) -> (i32, i32, i32) {
    %c0_i32 = arith.constant 0 : i32
    %c0_i32_0 = arith.constant 0 : i32
    return %arg0, %arg1, %c0_i32 : i32, i32, i32
  }
  func.func @transform_1(%arg0: i32, %arg1: i32) -> (i32, i32, i32) {
    %c0_i32 = arith.constant 0 : i32
    %c0_i32_0 = arith.constant 0 : i32
    return %arg0, %arg1, %c0_i32 : i32, i32, i32
  }
  func.func @transform_2(%arg0: i32, %arg1: i32) -> (i32, i32, i32) {
    %c0_i32 = arith.constant 0 : i32
    %c0_i32_0 = arith.constant 0 : i32
    return %arg0, %arg1, %c0_i32 : i32, i32, i32
  }
  func.func @transform_3(%arg0: i32, %arg1: i32) -> (i32, i32) {
    %c0_i32 = arith.constant 0 : i32
    %c0_i32_0 = arith.constant 0 : i32
    %c0_i32_1 = arith.constant 0 : i32
    return %c0_i32, %c0_i32_0 : i32, i32
  }
  func.func @transform_4(%arg0: i32, %arg1: i32) -> (i32, i32) {
    %c0_i32 = arith.constant 0 : i32
    %c0_i32_0 = arith.constant 0 : i32
    %c0_i32_1 = arith.constant 0 : i32
    return %c0_i32, %c0_i32_0 : i32, i32
  }
  func.func @transform_5(%arg0: i32, %arg1: i32) -> (i32, i32) {
    %c0_i32 = arith.constant 0 : i32
    %c0_i32_0 = arith.constant 0 : i32
    %c0_i32_1 = arith.constant 0 : i32
    return %c0_i32, %c0_i32_0 : i32, i32
  }
  func.func @transform_6(%arg0: i32, %arg1: i32) -> (i32, i32) {
    %c0_i32 = arith.constant 0 : i32
    %c0_i32_0 = arith.constant 0 : i32
    %c0_i32_1 = arith.constant 0 : i32
    return %c0_i32, %c0_i32_0 : i32, i32
  }
  func.func @transform_7(%arg0: i32, %arg1: i32) -> (i32, i32) {
    %c0_i32 = arith.constant 0 : i32
    %c0_i32_0 = arith.constant 0 : i32
    %c0_i32_1 = arith.constant 0 : i32
    return %c0_i32, %c0_i32_0 : i32, i32
  }
  func.func @transform_8(%arg0: i32, %arg1: i32) -> (i32, i32) {
    %c0_i32 = arith.constant 0 : i32
    %c0_i32_0 = arith.constant 0 : i32
    %c0_i32_1 = arith.constant 0 : i32
    return %c0_i32, %c0_i32_0 : i32, i32
  }
  func.func @transform_9(%arg0: i32, %arg1: i32) -> (i32, i32, i32) {
    %c0_i32 = arith.constant 0 : i32
    %c0_i32_0 = arith.constant 0 : i32
    return %arg0, %arg1, %c0_i32 : i32, i32, i32
  }
  func.func @transform_10(%arg0: i32, %arg1: i32) -> (i32, i32, i32) {
    %c0_i32 = arith.constant 0 : i32
    %c0_i32_0 = arith.constant 0 : i32
    return %arg0, %arg1, %c0_i32 : i32, i32, i32
  }
  func.func @transform_11(%arg0: i32, %arg1: i32) -> (i32, i32, i32) {
    %c0_i32 = arith.constant 0 : i32
    %c0_i32_0 = arith.constant 0 : i32
    return %arg0, %arg1, %c0_i32 : i32, i32, i32
  }
}

</mosaic_0001>

<llo_original>
// kernel: tpu_custom_call.1
$region0: #{tpu_custom_call.1}
  #allocation0 [shape = 'u32[]', space=smem, size = 0x4, offset = 0x4, fixed_abs, tag = 'smem constant byte address 0x4 - core index']
  #allocation1 [shape = 'u32[144,128]{1,0:T(1,128)}', space=vmem, size = 0x12000, scoped, tag = 'internal scratch']
  %s0 = inlined_call_operand.hbm [shape: f32[2,8,32], index: 0, kind: input, shape index: {}]
  %s1 = inlined_call_operand.hbm [shape: f32[2,8,32], index: 1, kind: input, shape index: {}]
  %s2 = inlined_call_operand.hbm [shape: f32[2,8,32], index: 2, kind: input, shape index: {}]
  %s3 = inlined_call_operand.hbm [shape: f32[32,32], index: 3, kind: input, shape index: {}]
  %s4 = inlined_call_operand.vmem [shape: f32[1,32], index: 4, kind: input, shape index: {}]
  %s5 = inlined_call_operand.hbm [shape: f32[32,32], index: 5, kind: input, shape index: {}]
  %s6 = inlined_call_operand.vmem [shape: f32[1,32], index: 6, kind: input, shape index: {}]
  %s7 = inlined_call_operand.hbm [shape: f32[32,32], index: 7, kind: input, shape index: {}]
  %s8 = inlined_call_operand.vmem [shape: f32[1,32], index: 8, kind: input, shape index: {}]
  %s9 = inlined_call_operand.hbm [shape: f32[2,8,32], index: 9, kind: output, shape index: {0}]
  %s10 = inlined_call_operand.hbm [shape: f32[2,8,32], index: 10, kind: output, shape index: {1}]
  %s11 = inlined_call_operand.hbm [shape: f32[2,8,32], index: 11, kind: output, shape index: {2}]
  %12 = xla_tuple %s9, %s10, %s11
  %s13 = sld [smem:[#allocation0]]
  $region109: #{tpu_custom_call.1} parent=0
    _
  %s15 = ssub.s32 1, %s13
  %s16 = scalar_select 0, %s15, %s13
  $region1: #{tpu_custom_call.1} parent=0
    #allocation2 [shape = 'u8[8192]{0}', space=vmem, size = 0x2000, scoped, tag = 'input window, operand 0']
    #allocation3 [shape = 's32[2]{0}', space=sflag, size = 0x8, scoped, tag = 'scoped memory for tpu_custom_call.1']
    #allocation4 [shape = 's32[2]{0}', space=sflag, size = 0x8, scoped, tag = 'scoped memory for tpu_custom_call.1']
    #allocation5 [shape = 'u8[8192]{0}', space=vmem, size = 0x2000, scoped, tag = 'input window, operand 1']
    #allocation6 [shape = 's32[2]{0}', space=sflag, size = 0x8, scoped, tag = 'scoped memory for tpu_custom_call.1']
    #allocation7 [shape = 'u8[8192]{0}', space=vmem, size = 0x2000, scoped, tag = 'input window, operand 2']
    #allocation8 [shape = 'u8[16384]{0}', space=vmem, size = 0x4000, scoped, tag = 'input window, operand 3, single buffered']
    #allocation9 [shape = 's32[1]{0}', space=sflag, size = 0x4, scoped, tag = 'scoped memory for tpu_custom_call.1']
    #allocation10 [shape = 'u8[16384]{0}', space=vmem, size = 0x4000, scoped, tag = 'input window, operand 5, single buffered']
    #allocation11 [shape = 'u8[16384]{0}', space=vmem, size = 0x4000, scoped, tag = 'input window, operand 7, single buffered']
    #allocation12 [shape = 's32[1]{0}', space=sflag, size = 0x4, scoped, tag = 'scoped memory for tpu_custom_call.1']
    #allocation13 [shape = 'u8[8192]{0}', space=vmem, size = 0x2000, scoped, tag = 'output window, operand 0']
    #allocation14 [shape = 'u8[8192]{0}', space=vmem, size = 0x2000, scoped, tag = 'output window, operand 1']
    #allocation15 [shape = 's32[2]{0}', space=sflag, size = 0x8, scoped, tag = 'scoped memory for tpu_custom_call.1']
    #allocation16 [shape = 'u8[8192]{0}', space=vmem, size = 0x2000, scoped, tag = 'output window, operand 2']
    %17 = vsyncpa [#allocation3], 0
    %s18 = scalar_lea.sflag [#allocation3], 1
    %19 = vsyncpa %s18, 0
    %20 = vsyncpa [#allocation6], 0
    %s21 = scalar_lea.sflag [#allocation6], 1
    %22 = vsyncpa %s21, 0
    %23 = vsyncpa [#allocation9], 0
    %24 = vsyncpa [#allocation12], 0
    %25 = vsyncpa [#allocation4], 0
    %s26 = scalar_lea.sflag [#allocation4], 1
    %27 = vsyncpa %s26, 0
    %28 = vsyncpa [#allocation15], 0
    %s29 = scalar_lea.sflag [#allocation15], 1
    %30 = vsyncpa %s29, 0
    loop: start=0, step=1, limit=4
    $region2: #{tpu_custom_call.1} parent=1 // loop_pre_header
      _
    $region3: #{tpu_custom_call.1} parent=1 // loop_header
      %s32 = sphi 0, %s36
      %p33 = scmp.ge.s32.totalorder %s32, 4
      %s39 = sphi 0, %s51
      %s40 = sphi 0, %s47
      %s41 = sphi 0, %s39
      %s42 = sphi 0, %s40
      %s43 = sphi 0, %s41
      %s44 = sphi 0, %s42
      %s56 = sphi 0, %s58
      %s59 = sphi 0, %s56
      %s60 = sphi 0, %s59
      %s76 = sphi 0, %s60
      %s84 = sphi 0, %s86
      %s87 = sphi 0, %s84
      %s88 = sphi 0, %s87
      %s104 = sphi 0, %s88
      %s112 = sphi 0, %s114
      %s115 = sphi 0, %s112
      %s116 = sphi 0, %s115
      %s132 = sphi 0, %s116
      %s136 = sphi 0, %s136
      %s138 = sphi 0, %s136
      %s139 = sphi 0, %s138
      %s153 = sphi 0, %s139
      %s157 = sphi 0, %s157
      %s159 = sphi 0, %s157
      %s160 = sphi 0, %s159
      %s174 = sphi 0, %s160
      %s178 = sphi 0, %s178
      %s180 = sphi 0, %s178
      %s181 = sphi 0, %s180
      %s195 = sphi 0, %s181
      %s199 = sphi 0, %s199
      %s201 = sphi 0, %s199
      %s202 = sphi 0, %s201
      %s216 = sphi 0, %s202
      %s220 = sphi 0, %s220
      %s222 = sphi 0, %s220
      %s223 = sphi 0, %s222
      %s237 = sphi 0, %s223
      %s241 = sphi 0, %s241
      %s243 = sphi 0, %s241
      %s244 = sphi 0, %s243
      %s258 = sphi 0, %s244
      %s266 = sphi 0, %s268
      %s269 = sphi 0, %s266
      %s270 = sphi 0, %s269
      %s286 = sphi 0, %s270
      %s294 = sphi 0, %s296
      %s297 = sphi 0, %s294
      %s298 = sphi 0, %s297
      %s314 = sphi 0, %s298
      %s322 = sphi 0, %s324
      %s325 = sphi 0, %s322
      %s326 = sphi 0, %s325
      %s342 = sphi 0, %s326
    $region4: #{tpu_custom_call.1} parent=1 // loop_header_branch
      %35 = sbr.rel (%p33) target = $region8
    $region5: #{tpu_custom_call.1} parent=1 // loop_body
      %s37 = ssub.s32 %s32, 1
      %s38 = ssub.s32 %s32, 2
      %s45 = sadd.s32 1, %s40
      %p46 = scmp.ge.s32.totalorder %s45, 1
      %s47 = scalar_select %p46, 0, %s45
      %s48 = sadd.s32 1, %s39
      %s49 = scalar_select %p46, %s48, %s39
      %p50 = scmp.ge.s32.totalorder %s49, 2
      %s51 = scalar_select %p50, 0, %s49
      %s52 = ssub.s32 %s39, %s51
      %s53 = ssub.s32 %s40, %s47
      %s54 = sor.u32 %s52, %s53
      %p55 = scmp.eq.s32.totalorder %s54, 0
      %s57 = sadd.s32 %s56, 1
      %s58 = scalar_select %p55, %s56, %s57
      %p61 = pneg %p55
      %p62 = scmp.eq.s32.totalorder %s32, 1
      %p63 = por %p61, %p62
      %p64 = scmp.ne.s32.totalorder %s56, %s59
      %p65 = scmp.eq.s32.totalorder %s32, 0
      %p66 = por %p64, %p65
      %p67 = scmp.ne.s32.totalorder %s56, %s59
      %p68 = scmp.eq.s32.totalorder %s37, 1
      %p69 = por %p67, %p68
      %p70 = scmp.ne.s32.totalorder %s59, %s60
      %p71 = scmp.eq.s32.totalorder %s37, 0
      %p72 = por %p70, %p71
      %p73 = scmp.ne.s32.totalorder %s59, %s60
      %p74 = scmp.eq.s32.totalorder %s38, 1
      %p75 = por %p73, %p74
      %p77 = scmp.ne.s32.totalorder %s60, %s76
      %p78 = scmp.eq.s32.totalorder %s38, 0
      %p79 = por %p77, %p78
      %s80 = ssub.s32 %s39, %s51
      %s81 = ssub.s32 %s40, %s47
      %s82 = sor.u32 %s80, %s81
      %p83 = scmp.eq.s32.totalorder %s82, 0
      %s85 = sadd.s32 %s84, 1
      %s86 = scalar_select %p83, %s84, %s85
      %p89 = pneg %p83
      %p90 = scmp.eq.s32.totalorder %s32, 1
      %p91 = por %p89, %p90
      %p92 = scmp.ne.s32.totalorder %s84, %s87
      %p93 = scmp.eq.s32.totalorder %s32, 0
      %p94 = por %p92, %p93
      %p95 = scmp.ne.s32.totalorder %s84, %s87
      %p96 = scmp.eq.s32.totalorder %s37, 1
      %p97 = por %p95, %p96
      %p98 = scmp.ne.s32.totalorder %s87, %s88
      %p99 = scmp.eq.s32.totalorder %s37, 0
      %p100 = por %p98, %p99
      %p101 = scmp.ne.s32.totalorder %s87, %s88
      %p102 = scmp.eq.s32.totalorder %s38, 1
      %p103 = por %p101, %p102
      %p105 = scmp.ne.s32.totalorder %s88, %s104
      %p106 = scmp.eq.s32.totalorder %s38, 0
      %p107 = por %p105, %p106
      %s108 = ssub.s32 %s39, %s51
      %s109 = ssub.s32 %s40, %s47
      %s110 = sor.u32 %s108, %s109
      %p111 = scmp.eq.s32.totalorder %s110, 0
      %s113 = sadd.s32 %s112, 1
      %s114 = scalar_select %p111, %s112, %s113
      %p117 = pneg %p111
      %p118 = scmp.eq.s32.totalorder %s32, 1
      %p119 = por %p117, %p118
      %p120 = scmp.ne.s32.totalorder %s112, %s115
      %p121 = scmp.eq.s32.totalorder %s32, 0
      %p122 = por %p120, %p121
      %p123 = scmp.ne.s32.totalorder %s112, %s115
      %p124 = scmp.eq.s32.totalorder %s37, 1
      %p125 = por %p123, %p124
      %p126 = scmp.ne.s32.totalorder %s115, %s116
      %p127 = scmp.eq.s32.totalorder %s37, 0
      %p128 = por %p126, %p127
      %p129 = scmp.ne.s32.totalorder %s115, %s116
      %p130 = scmp.eq.s32.totalorder %s38, 1
      %p131 = por %p129, %p130
      %p133 = scmp.ne.s32.totalorder %s116, %s132
      %p134 = scmp.eq.s32.totalorder %s38, 0
      %p135 = por %p133, %p134
      %s137 = sadd.s32 %s136, 1
      %p140 = scmp.eq.s32.totalorder %s32, 1
      %p141 = scmp.ne.s32.totalorder %s136, %s138
      %p142 = scmp.eq.s32.totalorder %s32, 0
      %p143 = por %p141, %p142
      %p144 = scmp.ne.s32.totalorder %s136, %s138
      %p145 = scmp.eq.s32.totalorder %s37, 1
      %p146 = por %p144, %p145
      %p147 = scmp.ne.s32.totalorder %s138, %s139
      %p148 = scmp.eq.s32.totalorder %s37, 0
      %p149 = por %p147, %p148
      %p150 = scmp.ne.s32.totalorder %s138, %s139
      %p151 = scmp.eq.s32.totalorder %s38, 1
      %p152 = por %p150, %p151
      %p154 = scmp.ne.s32.totalorder %s139, %s153
      %p155 = scmp.eq.s32.totalorder %s38, 0
      %p156 = por %p154, %p155
      %s158 = sadd.s32 %s157, 1
      %p161 = scmp.eq.s32.totalorder %s32, 1
      %p162 = scmp.ne.s32.totalorder %s157, %s159
      %p163 = scmp.eq.s32.totalorder %s32, 0
      %p164 = por %p162, %p163
      %p165 = scmp.ne.s32.totalorder %s157, %s159
      %p166 = scmp.eq.s32.totalorder %s37, 1
      %p167 = por %p165, %p166
      %p168 = scmp.ne.s32.totalorder %s159, %s160
      %p169 = scmp.eq.s32.totalorder %s37, 0
      %p170 = por %p168, %p169
      %p171 = scmp.ne.s32.totalorder %s159, %s160
      %p172 = scmp.eq.s32.totalorder %s38, 1
      %p173 = por %p171, %p172
      %p175 = scmp.ne.s32.totalorder %s160, %s174
      %p176 = scmp.eq.s32.totalorder %s38, 0
      %p177 = por %p175, %p176
      %s179 = sadd.s32 %s178, 1
      %p182 = scmp.eq.s32.totalorder %s32, 1
      %p183 = scmp.ne.s32.totalorder %s178, %s180
      %p184 = scmp.eq.s32.totalorder %s32, 0
      %p185 = por %p183, %p184
      %p186 = scmp.ne.s32.totalorder %s178, %s180
      %p187 = scmp.eq.s32.totalorder %s37, 1
      %p188 = por %p186, %p187
      %p189 = scmp.ne.s32.totalorder %s180, %s181
      %p190 = scmp.eq.s32.totalorder %s37, 0
      %p191 = por %p189, %p190
      %p192 = scmp.ne.s32.totalorder %s180, %s181
      %p193 = scmp.eq.s32.totalorder %s38, 1
      %p194 = por %p192, %p193
      %p196 = scmp.ne.s32.totalorder %s181, %s195
      %p197 = scmp.eq.s32.totalorder %s38, 0
      %p198 = por %p196, %p197
      %s200 = sadd.s32 %s199, 1
      %p203 = scmp.eq.s32.totalorder %s32, 1
      %p204 = scmp.ne.s32.totalorder %s199, %s201
      %p205 = scmp.eq.s32.totalorder %s32, 0
      %p206 = por %p204, %p205
      %p207 = scmp.ne.s32.totalorder %s199, %s201
      %p208 = scmp.eq.s32.totalorder %s37, 1
      %p209 = por %p207, %p208
      %p210 = scmp.ne.s32.totalorder %s201, %s202
      %p211 = scmp.eq.s32.totalorder %s37, 0
      %p212 = por %p210, %p211
      %p213 = scmp.ne.s32.totalorder %s201, %s202
      %p214 = scmp.eq.s32.totalorder %s38, 1
      %p215 = por %p213, %p214
      %p217 = scmp.ne.s32.totalorder %s202, %s216
      %p218 = scmp.eq.s32.totalorder %s38, 0
      %p219 = por %p217, %p218
      %s221 = sadd.s32 %s220, 1
      %p224 = scmp.eq.s32.totalorder %s32, 1
      %p225 = scmp.ne.s32.totalorder %s220, %s222
      %p226 = scmp.eq.s32.totalorder %s32, 0
      %p227 = por %p225, %p226
      %p228 = scmp.ne.s32.totalorder %s220, %s222
      %p229 = scmp.eq.s32.totalorder %s37, 1
      %p230 = por %p228, %p229
      %p231 = scmp.ne.s32.totalorder %s222, %s223
      %p232 = scmp.eq.s32.totalorder %s37, 0
      %p233 = por %p231, %p232
      %p234 = scmp.ne.s32.totalorder %s222, %s223
      %p235 = scmp.eq.s32.totalorder %s38, 1
      %p236 = por %p234, %p235
      %p238 = scmp.ne.s32.totalorder %s223, %s237
      %p239 = scmp.eq.s32.totalorder %s38, 0
      %p240 = por %p238, %p239
      %s242 = sadd.s32 %s241, 1
      %p245 = scmp.eq.s32.totalorder %s32, 1
      %p246 = scmp.ne.s32.totalorder %s241, %s243
      %p247 = scmp.eq.s32.totalorder %s32, 0
      %p248 = por %p246, %p247
      %p249 = scmp.ne.s32.totalorder %s241, %s243
      %p250 = scmp.eq.s32.totalorder %s37, 1
      %p251 = por %p249, %p250
      %p252 = scmp.ne.s32.totalorder %s243, %s244
      %p253 = scmp.eq.s32.totalorder %s37, 0
      %p254 = por %p252, %p253
      %p255 = scmp.ne.s32.totalorder %s243, %s244
      %p256 = scmp.eq.s32.totalorder %s38, 1
      %p257 = por %p255, %p256
      %p259 = scmp.ne.s32.totalorder %s244, %s258
      %p260 = scmp.eq.s32.totalorder %s38, 0
      %p261 = por %p259, %p260
      %s262 = ssub.s32 %s39, %s51
      %s263 = ssub.s32 %s40, %s47
      %s264 = sor.u32 %s262, %s263
      %p265 = scmp.eq.s32.totalorder %s264, 0
      %s267 = sadd.s32 %s266, 1
      %s268 = scalar_select %p265, %s266, %s267
      %p271 = pneg %p265
      %p272 = scmp.eq.s32.totalorder %s32, 1
      %p273 = por %p271, %p272
      %p274 = scmp.ne.s32.totalorder %s266, %s269
      %p275 = scmp.eq.s32.totalorder %s32, 0
      %p276 = por %p274, %p275
      %p277 = scmp.ne.s32.totalorder %s266, %s269
      %p278 = scmp.eq.s32.totalorder %s37, 1
      %p279 = por %p277, %p278
      %p280 = scmp.ne.s32.totalorder %s269, %s270
      %p281 = scmp.eq.s32.totalorder %s37, 0
      %p282 = por %p280, %p281
      %p283 = scmp.ne.s32.totalorder %s269, %s270
      %p284 = scmp.eq.s32.totalorder %s38, 1
      %p285 = por %p283, %p284
      %p287 = scmp.ne.s32.totalorder %s270, %s286
      %p288 = scmp.eq.s32.totalorder %s38, 0
      %p289 = por %p287, %p288
      %s290 = ssub.s32 %s39, %s51
      %s291 = ssub.s32 %s40, %s47
      %s292 = sor.u32 %s290, %s291
      %p293 = scmp.eq.s32.totalorder %s292, 0
      %s295 = sadd.s32 %s294, 1
      %s296 = scalar_select %p293, %s294, %s295
      %p299 = pneg %p293
      %p300 = scmp.eq.s32.totalorder %s32, 1
      %p301 = por %p299, %p300
      %p302 = scmp.ne.s32.totalorder %s294, %s297
      %p303 = scmp.eq.s32.totalorder %s32, 0
      %p304 = por %p302, %p303
      %p305 = scmp.ne.s32.totalorder %s294, %s297
      %p306 = scmp.eq.s32.totalorder %s37, 1
      %p307 = por %p305, %p306
      %p308 = scmp.ne.s32.totalorder %s297, %s298
      %p309 = scmp.eq.s32.totalorder %s37, 0
      %p310 = por %p308, %p309
      %p311 = scmp.ne.s32.totalorder %s297, %s298
      %p312 = scmp.eq.s32.totalorder %s38, 1
      %p313 = por %p311, %p312
      %p315 = scmp.ne.s32.totalorder %s298, %s314
      %p316 = scmp.eq.s32.totalorder %s38, 0
      %p317 = por %p315, %p316
      %s318 = ssub.s32 %s39, %s51
      %s319 = ssub.s32 %s40, %s47
      %s320 = sor.u32 %s318, %s319
      %p321 = scmp.eq.s32.totalorder %s320, 0
      %s323 = sadd.s32 %s322, 1
      %s324 = scalar_select %p321, %s322, %s323
      %p327 = pneg %p321
      %p328 = scmp.eq.s32.totalorder %s32, 1
      %p329 = por %p327, %p328
      %p330 = scmp.ne.s32.totalorder %s322, %s325
      %p331 = scmp.eq.s32.totalorder %s32, 0
      %p332 = por %p330, %p331
      %p333 = scmp.ne.s32.totalorder %s322, %s325
      %p334 = scmp.eq.s32.totalorder %s37, 1
      %p335 = por %p333, %p334
      %p336 = scmp.ne.s32.totalorder %s325, %s326
      %p337 = scmp.eq.s32.totalorder %s37, 0
      %p338 = por %p336, %p337
      %p339 = scmp.ne.s32.totalorder %s325, %s326
      %p340 = scmp.eq.s32.totalorder %s38, 1
      %p341 = por %p339, %p340
      %p343 = scmp.ne.s32.totalorder %s326, %s342
      %p344 = scmp.eq.s32.totalorder %s38, 0
      %p345 = por %p343, %p344
      %p346 = scmp.le.s32.totalorder 1, %s32
      %p347 = scmp.lt.s32.totalorder %s32, 3
      %p348 = pnand %p346, %p347
      %p349 = pneg %p348
      // Predicated region
      $region9: #{tpu_custom_call.1} parent=5 // pred_check
        _
      $region10: #{tpu_custom_call.1} parent=5 // pred_check_branch
        %351 = sbr.rel (%p348) target = $region12
      $region11: #{tpu_custom_call.1} parent=5 // pred_region
        %s352 = ssub.s32 %s32, 1
        // Predicated region
        $region13: #{tpu_custom_call.1} parent=11 // pred_check
          %p353 = pneg %p149
        $region14: #{tpu_custom_call.1} parent=11 // pred_check_branch
          %355 = sbr.rel (%p353) target = $region16
        $region15: #{tpu_custom_call.1} parent=11 // pred_region
          %s357 = ssub.s32 512, 512
          %358 = vsyncadd [#allocation9], %s357
          %s359 = sshll.u32 [#allocation8], 4
          %s360 = int_to_ptr.vmem [resolvable:$true] %s359
          %365 = dma.hbm_to_vmem [thread:$0]  %s3, 512, %s360, [#allocation9], 128, 128, 8
        $region16: #{tpu_custom_call.1} parent=11 // pred_fallthru
          _
        // Predicated region
        $region17: #{tpu_custom_call.1} parent=11 // pred_check
          %p366 = pneg %p170
        $region18: #{tpu_custom_call.1} parent=11 // pred_check_branch
          %368 = sbr.rel (%p366) target = $region20
        $region19: #{tpu_custom_call.1} parent=11 // pred_region
          _
        $region20: #{tpu_custom_call.1} parent=11 // pred_fallthru
          _
        // Predicated region
        $region21: #{tpu_custom_call.1} parent=11 // pred_check
          %p369 = pneg %p191
        $region22: #{tpu_custom_call.1} parent=11 // pred_check_branch
          %371 = sbr.rel (%p369) target = $region24
        $region23: #{tpu_custom_call.1} parent=11 // pred_region
          %s373 = ssub.s32 512, 512
          %374 = vsyncadd [#allocation9], %s373
          %s375 = sshll.u32 [#allocation10], 4
          %s376 = int_to_ptr.vmem [resolvable:$true] %s375
          %381 = dma.hbm_to_vmem [thread:$0]  %s5, 512, %s376, [#allocation9], 128, 128, 8
        $region24: #{tpu_custom_call.1} parent=11 // pred_fallthru
          _
        // Predicated region
        $region25: #{tpu_custom_call.1} parent=11 // pred_check
          %p382 = pneg %p212
        $region26: #{tpu_custom_call.1} parent=11 // pred_check_branch
          %384 = sbr.rel (%p382) target = $region28
        $region27: #{tpu_custom_call.1} parent=11 // pred_region
          _
        $region28: #{tpu_custom_call.1} parent=11 // pred_fallthru
          _
        // Predicated region
        $region29: #{tpu_custom_call.1} parent=11 // pred_check
          %p385 = pneg %p233
        $region30: #{tpu_custom_call.1} parent=11 // pred_check_branch
          %387 = sbr.rel (%p385) target = $region32
        $region31: #{tpu_custom_call.1} parent=11 // pred_region
          %s389 = ssub.s32 512, 512
          %390 = vsyncadd [#allocation12], %s389
          %s391 = sshll.u32 [#allocation11], 4
          %s392 = int_to_ptr.vmem [resolvable:$true] %s391
          %397 = dma.hbm_to_vmem [thread:$0]  %s7, 512, %s392, [#allocation12], 128, 128, 8
        $region32: #{tpu_custom_call.1} parent=11 // pred_fallthru
          _
        // Predicated region
        $region33: #{tpu_custom_call.1} parent=11 // pred_check
          %p398 = pneg %p254
        $region34: #{tpu_custom_call.1} parent=11 // pred_check_branch
          %400 = sbr.rel (%p398) target = $region36
        $region35: #{tpu_custom_call.1} parent=11 // pred_region
          _
        $region36: #{tpu_custom_call.1} parent=11 // pred_fallthru
          _
      $region12: #{tpu_custom_call.1} parent=5 // pred_fallthru
        _
      %p401 = scmp.lt.s32.totalorder %s32, 2
      // Predicated region
      $region37: #{tpu_custom_call.1} parent=5 // pred_check
        %p402 = pneg %p401
      $region38: #{tpu_custom_call.1} parent=5 // pred_check_branch
        %404 = sbr.rel (%p402) target = $region40
      $region39: #{tpu_custom_call.1} parent=5 // pred_region
        // Predicated region
        $region41: #{tpu_custom_call.1} parent=39 // pred_check
          %p405 = pneg %p66
        $region42: #{tpu_custom_call.1} parent=39 // pred_check_branch
          %407 = sbr.rel (%p405) target = $region44
        $region43: #{tpu_custom_call.1} parent=39 // pred_region
          %s408 = sand.u32 %s56, 1
          %s409 = scalar_lea.sflag [#allocation3], %s408
          %s410 = sand.u32 %s56, 1
          %s411 = smul.addr %s410, 8
          %s412 = scalar_lea.vmem [#allocation2], %s411
          %s414 = ssub.s32 128, 128
          %415 = vsyncadd %s409, %s414
          %s416 = sadd.s32 %s40, %s39
          %s417 = smul.addr %s416, 128
          %s418 = scalar_lea.hbm %s0, %s417
          %s420 = sshll.u32 %s412, 4
          %s421 = int_to_ptr.vmem [resolvable:$true] %s420
          %423 = dma.hbm_to_vmem [thread:$0]  %s418, 128, %s421, %s409
        $region44: #{tpu_custom_call.1} parent=39 // pred_fallthru
          _
        // Predicated region
        $region45: #{tpu_custom_call.1} parent=39 // pred_check
          %p424 = pneg %p94
        $region46: #{tpu_custom_call.1} parent=39 // pred_check_branch
          %426 = sbr.rel (%p424) target = $region48
        $region47: #{tpu_custom_call.1} parent=39 // pred_region
          %s427 = sand.u32 %s32, 1
          %s428 = scalar_lea.sflag [#allocation6], %s427
          %s429 = sand.u32 %s84, 1
          %s430 = smul.addr %s429, 8
          %s431 = scalar_lea.vmem [#allocation5], %s430
          %s433 = ssub.s32 128, 128
          %434 = vsyncadd %s428, %s433
          %s435 = sadd.s32 %s40, %s39
          %s436 = smul.addr %s435, 128
          %s437 = scalar_lea.hbm %s1, %s436
          %s439 = sshll.u32 %s431, 4
          %s440 = int_to_ptr.vmem [resolvable:$true] %s439
          %442 = dma.hbm_to_vmem [thread:$0]  %s437, 128, %s440, %s428
        $region48: #{tpu_custom_call.1} parent=39 // pred_fallthru
          _
        // Predicated region
        $region49: #{tpu_custom_call.1} parent=39 // pred_check
          %p443 = pneg %p122
        $region50: #{tpu_custom_call.1} parent=39 // pred_check_branch
          %445 = sbr.rel (%p443) target = $region52
        $region51: #{tpu_custom_call.1} parent=39 // pred_region
          %s446 = sand.u32 %s32, 1
          %s447 = scalar_lea.sflag [#allocation6], %s446
          %s448 = sand.u32 %s112, 1
          %s449 = smul.addr %s448, 8
          %s450 = scalar_lea.vmem [#allocation7], %s449
          %s452 = ssub.s32 128, 128
          %453 = vsyncadd %s447, %s452
          %s454 = sadd.s32 %s40, %s39
          %s455 = smul.addr %s454, 128
          %s456 = scalar_lea.hbm %s2, %s455
          %s458 = sshll.u32 %s450, 4
          %s459 = int_to_ptr.vmem [resolvable:$true] %s458
          %461 = dma.hbm_to_vmem [thread:$0]  %s456, 128, %s459, %s447
        $region52: #{tpu_custom_call.1} parent=39 // pred_fallthru
          _
      $region40: #{tpu_custom_call.1} parent=5 // pred_fallthru
        _
      %p462 = scmp.le.s32.totalorder 1, %s32
      %p463 = scmp.lt.s32.totalorder %s32, 3
      %p464 = pnand %p462, %p463
      %p465 = pneg %p464
      // Predicated region
      $region53: #{tpu_custom_call.1} parent=5 // pred_check
        _
      $region54: #{tpu_custom_call.1} parent=5 // pred_check_branch
        %467 = sbr.rel (%p464) target = $region56
      $region55: #{tpu_custom_call.1} parent=5 // pred_region
        %s468 = ssub.s32 %s32, 1
        %s469 = sand.u32 %s59, 1
        %s470 = scalar_lea.sflag [#allocation3], %s469
        %s471 = sand.u32 %s59, 1
        %s472 = smul.addr %s471, 8
        %s473 = scalar_lea.vmem [#allocation2], %s472
        // Predicated region
        $region57: #{tpu_custom_call.1} parent=55 // pred_check
          %p474 = pneg %p72
        $region58: #{tpu_custom_call.1} parent=55 // pred_check_branch
          %476 = sbr.rel (%p474) target = $region60
        $region59: #{tpu_custom_call.1} parent=55 // pred_region
          %477 = dma.done %s470, 128
        $region60: #{tpu_custom_call.1} parent=55 // pred_fallthru
          _
        %s478 = sand.u32 %s37, 1
        %s479 = scalar_lea.sflag [#allocation6], %s478
        %s480 = sand.u32 %s87, 1
        %s481 = smul.addr %s480, 8
        %s482 = scalar_lea.vmem [#allocation5], %s481
        // Predicated region
        $region61: #{tpu_custom_call.1} parent=55 // pred_check
          %p483 = pneg %p100
        $region62: #{tpu_custom_call.1} parent=55 // pred_check_branch
          %485 = sbr.rel (%p483) target = $region64
        $region63: #{tpu_custom_call.1} parent=55 // pred_region
          %486 = dma.done %s479, 128
        $region64: #{tpu_custom_call.1} parent=55 // pred_fallthru
          _
        %s487 = sand.u32 %s37, 1
        %s488 = scalar_lea.sflag [#allocation6], %s487
        %s489 = sand.u32 %s115, 1
        %s490 = smul.addr %s489, 8
        %s491 = scalar_lea.vmem [#allocation7], %s490
        // Predicated region
        $region65: #{tpu_custom_call.1} parent=55 // pred_check
          %p492 = pneg %p128
        $region66: #{tpu_custom_call.1} parent=55 // pred_check_branch
          %494 = sbr.rel (%p492) target = $region68
        $region67: #{tpu_custom_call.1} parent=55 // pred_region
          %495 = dma.done %s488, 128
        $region68: #{tpu_custom_call.1} parent=55 // pred_fallthru
          _
        // Predicated region
        $region69: #{tpu_custom_call.1} parent=55 // pred_check
          %p496 = pneg %p149
        $region70: #{tpu_custom_call.1} parent=55 // pred_check_branch
          %498 = sbr.rel (%p496) target = $region72
        $region71: #{tpu_custom_call.1} parent=55 // pred_region
          %499 = dma.done [#allocation9], 512
        $region72: #{tpu_custom_call.1} parent=55 // pred_fallthru
          _
        // Predicated region
        $region73: #{tpu_custom_call.1} parent=55 // pred_check
          %p500 = pneg %p191
        $region74: #{tpu_custom_call.1} parent=55 // pred_check_branch
          %502 = sbr.rel (%p500) target = $region76
        $region75: #{tpu_custom_call.1} parent=55 // pred_region
          %503 = dma.done [#allocation9], 512
        $region76: #{tpu_custom_call.1} parent=55 // pred_fallthru
          _
        // Predicated region
        $region77: #{tpu_custom_call.1} parent=55 // pred_check
          %p504 = pneg %p233
        $region78: #{tpu_custom_call.1} parent=55 // pred_check_branch
          %506 = sbr.rel (%p504) target = $region80
        $region79: #{tpu_custom_call.1} parent=55 // pred_region
          %507 = dma.done [#allocation12], 512
        $region80: #{tpu_custom_call.1} parent=55 // pred_fallthru
          _
        %s508 = sand.u32 %s59, 1
        %s509 = scalar_lea.sflag [#allocation3], %s508
        %s510 = sand.u32 %s59, 1
        %s511 = smul.addr %s510, 8
        %s512 = scalar_lea.vmem [#allocation2], %s511
        %p513 = pneg %p72
        %p514 = pneg %p69
        %s515 = sand.u32 %s37, 1
        %s516 = scalar_lea.sflag [#allocation6], %s515
        %s517 = sand.u32 %s87, 1
        %s518 = smul.addr %s517, 8
        %s519 = scalar_lea.vmem [#allocation5], %s518
        %p520 = pneg %p100
        %p521 = pneg %p97
        %s522 = sand.u32 %s37, 1
        %s523 = scalar_lea.sflag [#allocation6], %s522
        %s524 = sand.u32 %s115, 1
        %s525 = smul.addr %s524, 8
        %s526 = scalar_lea.vmem [#allocation7], %s525
        %p527 = pneg %p128
        %p528 = pneg %p125
        %p529 = pneg %p149
        %p530 = pneg %p146
        %p531 = pneg %p170
        %p532 = pneg %p167
        %p533 = pneg %p191
        %p534 = pneg %p188
        %p535 = pneg %p212
        %p536 = pneg %p209
        %p537 = pneg %p233
        %p538 = pneg %p230
        %p539 = pneg %p254
        %p540 = pneg %p251
        %p541 = pneg %p282
        %p542 = pneg %p279
        %s543 = sand.u32 %s269, 1
        %s544 = scalar_lea.sflag [#allocation4], %s543
        %s545 = sand.u32 %s269, 1
        %s546 = smul.addr %s545, 8
        %s547 = scalar_lea.vmem [#allocation13], %s546
        %p548 = pneg %p310
        %p549 = pneg %p307
        %s550 = sand.u32 %s37, 1
        %s551 = scalar_lea.sflag [#allocation15], %s550
        %s552 = sand.u32 %s297, 1
        %s553 = smul.addr %s552, 8
        %s554 = scalar_lea.vmem [#allocation14], %s553
        %p555 = pneg %p338
        %p556 = pneg %p335
        %s557 = sand.u32 %s37, 1
        %s558 = scalar_lea.sflag [#allocation15], %s557
        %s559 = sand.u32 %s325, 1
        %s560 = smul.addr %s559, 8
        %s561 = scalar_lea.vmem [#allocation16], %s560
        %v562 = vld [vmem:[%s473] sm:$0xff]
        %v563 = vld [vmem:[#allocation8] sm:$0xff]
        %v564 = vld [vmem:[#allocation8 + $0x8] sm:$0xff]
        %v565 = vld [vmem:[#allocation8 + $0x10] sm:$0xff]
        %v566 = vld [vmem:[#allocation8 + $0x18] sm:$0xff]
        %v567 = vld [vmem:[%s4] sm:$0x1]
        %v569 = vlaneseq
        %v570 = vshrl.u32 %v569, 7
        %v571 = vsub.s32 0, %v570
        %v572 = vrot.slane %v567, %v571
        %vm574 = vcmask 261120
        %v576 = vsel %vm574, %v562, 0
        %578 = vmatprep.subr.mxu0 0.0
        %579 = vmatpush1.msra.mxu0 %v563
        %580 = vmatprep.subr.mxu0 0.0
        %581 = vmatpush1.msra.mxu0 %v564
        %582 = vmatprep.subr.mxu0 0.0
        %583 = vmatpush1.msra.mxu0 %v565
        %584 = vmatprep.subr.mxu0 0.0
        %585 = vmatpush1.msra.mxu0 %v566
        %586 = vmatprep.subr.mxu0 0.0
        %587 = vmatpush1.msra.mxu0 0.0
        %588 = vmatprep.subr.mxu0 0.0
        %589 = vmatpush1.msra.mxu0 0.0
        %590 = vmatprep.subr.mxu0 0.0
        %591 = vmatpush1.msra.mxu0 0.0
        %592 = vmatprep.subr.mxu0 0.0
        %593 = vmatpush1.msra.mxu0 0.0
        %594 = vmatprep.subr.mxu0 0.0
        %595 = vmatpush1.msra.mxu0 0.0
        %596 = vmatprep.subr.mxu0 0.0
        %597 = vmatpush1.msra.mxu0 0.0
        %598 = vmatprep.subr.mxu0 0.0
        %599 = vmatpush1.msra.mxu0 0.0
        %600 = vmatprep.subr.mxu0 0.0
        %601 = vmatpush1.msra.mxu0 0.0
        %602 = vmatprep.subr.mxu0 0.0
        %603 = vmatpush1.msra.mxu0 0.0
        %604 = vmatprep.subr.mxu0 0.0
        %605 = vmatpush1.msra.mxu0 0.0
        %606 = vmatprep.subr.mxu0 0.0
        %607 = vmatpush1.msra.mxu0 0.0
        %608 = vmatprep.subr.mxu0 0.0
        %609 = vmatpush1.msra.mxu0 0.0
        %610 = vmatprep.subr.mxu0 0.0
        %611 = vmatpush1.msra.mxu0 0.0
        %612 = vmatprep.subr.mxu0 0.0
        %613 = vmatpush1.msra.mxu0 0.0
        %614 = vmatprep.subr.mxu0 0.0
        %615 = vmatpush1.msra.mxu0 0.0
        %616 = vmatprep.subr.mxu0 0.0
        %617 = vmatpush1.msra.mxu0 0.0
        %618 = vmatprep.subr.mxu0 0.0
        %619 = vmatpush1.msra.mxu0 0.0
        %620 = vmatprep.subr.mxu0 0.0
        %621 = vmatpush1.msra.mxu0 0.0
        %622 = vmatprep.subr.mxu0 0.0
        %623 = vmatpush1.msra.mxu0 0.0
        %624 = vmatprep.subr.mxu0 0.0
        %625 = vmatpush1.msra.mxu0 0.0
        %626 = vmatprep.subr.mxu0 0.0
        %627 = vmatpush1.msra.mxu0 0.0
        %628 = vmatprep.subr.mxu0 0.0
        %629 = vmatpush1.msra.mxu0 0.0
        %630 = vmatprep.subr.mxu0 0.0
        %631 = vmatpush1.msra.mxu0 0.0
        %632 = vmatprep.subr.mxu0 0.0
        %633 = vmatpush1.msra.mxu0 0.0
        %634 = vmatprep.subr.mxu0 0.0
        %635 = vmatpush1.msra.mxu0 0.0
        %636 = vmatprep.subr.mxu0 0.0
        %637 = vmatpush1.msra.mxu0 0.0
        %638 = vmatprep.subr.mxu0 0.0
        %639 = vmatpush1.msra.mxu0 0.0
        %640 = vmatprep.subr.mxu0 0.0
        %641 = vmatpush1.msra.mxu0 0.0
        %642 = vmatprep.mubr.f32.mxu0 0.0
        %643 = vmatmul.mubr.f32.gmra.mrb[0].mxu0 %v576
        %v644 = vpop.f32.mrb[0].mxu0
        %v645 = vadd.f32 %v572, %v644
        %v646 = vpop.f32.mrb[0].mxu0
        %647 = vdwg.mxu0
        %648 = vst.msk [vmem:[%s547] sm:$0xff] %vm574, %v645
        %v649 = vld [vmem:[%s482] sm:$0xff]
        %v650 = vld [vmem:[#allocation10] sm:$0xff]
        %v651 = vld [vmem:[#allocation10 + $0x8] sm:$0xff]
        %v652 = vld [vmem:[#allocation10 + $0x10] sm:$0xff]
        %v653 = vld [vmem:[#allocation10 + $0x18] sm:$0xff]
        %v654 = vld [vmem:[%s6] sm:$0x1]
        %v656 = vlaneseq
        %v657 = vshrl.u32 %v656, 7
        %v658 = vsub.s32 0, %v657
        %v659 = vrot.slane %v654, %v658
        %v662 = vsel %vm574, %v649, 0
        %664 = vmatprep.subr.mxu0 0.0
        %665 = vmatpush1.msra.mxu0 %v650
        %666 = vmatprep.subr.mxu0 0.0
        %667 = vmatpush1.msra.mxu0 %v651
        %668 = vmatprep.subr.mxu0 0.0
        %669 = vmatpush1.msra.mxu0 %v652
        %670 = vmatprep.subr.mxu0 0.0
        %671 = vmatpush1.msra.mxu0 %v653
        %672 = vmatprep.subr.mxu0 0.0
        %673 = vmatpush1.msra.mxu0 0.0
        %674 = vmatprep.subr.mxu0 0.0
        %675 = vmatpush1.msra.mxu0 0.0
        %676 = vmatprep.subr.mxu0 0.0
        %677 = vmatpush1.msra.mxu0 0.0
        %678 = vmatprep.subr.mxu0 0.0
        %679 = vmatpush1.msra.mxu0 0.0
        %680 = vmatprep.subr.mxu0 0.0
        %681 = vmatpush1.msra.mxu0 0.0
        %682 = vmatprep.subr.mxu0 0.0
        %683 = vmatpush1.msra.mxu0 0.0
        %684 = vmatprep.subr.mxu0 0.0
        %685 = vmatpush1.msra.mxu0 0.0
        %686 = vmatprep.subr.mxu0 0.0
        %687 = vmatpush1.msra.mxu0 0.0
        %688 = vmatprep.subr.mxu0 0.0
        %689 = vmatpush1.msra.mxu0 0.0
        %690 = vmatprep.subr.mxu0 0.0
        %691 = vmatpush1.msra.mxu0 0.0
        %692 = vmatprep.subr.mxu0 0.0
        %693 = vmatpush1.msra.mxu0 0.0
        %694 = vmatprep.subr.mxu0 0.0
        %695 = vmatpush1.msra.mxu0 0.0
        %696 = vmatprep.subr.mxu0 0.0
        %697 = vmatpush1.msra.mxu0 0.0
        %698 = vmatprep.subr.mxu0 0.0
        %699 = vmatpush1.msra.mxu0 0.0
        %700 = vmatprep.subr.mxu0 0.0
        %701 = vmatpush1.msra.mxu0 0.0
        %702 = vmatprep.subr.mxu0 0.0
        %703 = vmatpush1.msra.mxu0 0.0
        %704 = vmatprep.subr.mxu0 0.0
        %705 = vmatpush1.msra.mxu0 0.0
        %706 = vmatprep.subr.mxu0 0.0
        %707 = vmatpush1.msra.mxu0 0.0
        %708 = vmatprep.subr.mxu0 0.0
        %709 = vmatpush1.msra.mxu0 0.0
        %710 = vmatprep.subr.mxu0 0.0
        %711 = vmatpush1.msra.mxu0 0.0
        %712 = vmatprep.subr.mxu0 0.0
        %713 = vmatpush1.msra.mxu0 0.0
        %714 = vmatprep.subr.mxu0 0.0
        %715 = vmatpush1.msra.mxu0 0.0
        %716 = vmatprep.subr.mxu0 0.0
        %717 = vmatpush1.msra.mxu0 0.0
        %718 = vmatprep.subr.mxu0 0.0
        %719 = vmatpush1.msra.mxu0 0.0
        %720 = vmatprep.subr.mxu0 0.0
        %721 = vmatpush1.msra.mxu0 0.0
        %722 = vmatprep.subr.mxu0 0.0
        %723 = vmatpush1.msra.mxu0 0.0
        %724 = vmatprep.subr.mxu0 0.0
        %725 = vmatpush1.msra.mxu0 0.0
        %726 = vmatprep.subr.mxu0 0.0
        %727 = vmatpush1.msra.mxu0 0.0
        %728 = vmatprep.mubr.f32.mxu0 0.0
        %729 = vmatmul.mubr.f32.gmra.mrb[0].mxu0 %v662
        %v730 = vpop.f32.mrb[0].mxu0
        %v731 = vadd.f32 %v659, %v730
        %v732 = vpop.f32.mrb[0].mxu0
        %733 = vdwg.mxu0
        %734 = vst.msk [vmem:[%s554] sm:$0xff] %vm574, %v731
        %v735 = vld [vmem:[%s491] sm:$0xff]
        %v736 = vld [vmem:[#allocation11] sm:$0xff]
        %v737 = vld [vmem:[#allocation11 + $0x8] sm:$0xff]
        %v738 = vld [vmem:[#allocation11 + $0x10] sm:$0xff]
        %v739 = vld [vmem:[#allocation11 + $0x18] sm:$0xff]
        %v740 = vld [vmem:[%s8] sm:$0x1]
        %v742 = vlaneseq
        %v743 = vshrl.u32 %v742, 7
        %v744 = vsub.s32 0, %v743
        %v745 = vrot.slane %v740, %v744
        %v748 = vsel %vm574, %v735, 0
        %750 = vmatprep.subr.mxu0 0.0
        %751 = vmatpush1.msra.mxu0 %v736
        %752 = vmatprep.subr.mxu0 0.0
        %753 = vmatpush1.msra.mxu0 %v737
        %754 = vmatprep.subr.mxu0 0.0
        %755 = vmatpush1.msra.mxu0 %v738
        %756 = vmatprep.subr.mxu0 0.0
        %757 = vmatpush1.msra.mxu0 %v739
        %758 = vmatprep.subr.mxu0 0.0
        %759 = vmatpush1.msra.mxu0 0.0
        %760 = vmatprep.subr.mxu0 0.0
        %761 = vmatpush1.msra.mxu0 0.0
        %762 = vmatprep.subr.mxu0 0.0
        %763 = vmatpush1.msra.mxu0 0.0
        %764 = vmatprep.subr.mxu0 0.0
        %765 = vmatpush1.msra.mxu0 0.0
        %766 = vmatprep.subr.mxu0 0.0
        %767 = vmatpush1.msra.mxu0 0.0
        %768 = vmatprep.subr.mxu0 0.0
        %769 = vmatpush1.msra.mxu0 0.0
        %770 = vmatprep.subr.mxu0 0.0
        %771 = vmatpush1.msra.mxu0 0.0
        %772 = vmatprep.subr.mxu0 0.0
        %773 = vmatpush1.msra.mxu0 0.0
        %774 = vmatprep.subr.mxu0 0.0
        %775 = vmatpush1.msra.mxu0 0.0
        %776 = vmatprep.subr.mxu0 0.0
        %777 = vmatpush1.msra.mxu0 0.0
        %778 = vmatprep.subr.mxu0 0.0
        %779 = vmatpush1.msra.mxu0 0.0
        %780 = vmatprep.subr.mxu0 0.0
        %781 = vmatpush1.msra.mxu0 0.0
        %782 = vmatprep.subr.mxu0 0.0
        %783 = vmatpush1.msra.mxu0 0.0
        %784 = vmatprep.subr.mxu0 0.0
        %785 = vmatpush1.msra.mxu0 0.0
        %786 = vmatprep.subr.mxu0 0.0
        %787 = vmatpush1.msra.mxu0 0.0
        %788 = vmatprep.subr.mxu0 0.0
        %789 = vmatpush1.msra.mxu0 0.0
        %790 = vmatprep.subr.mxu0 0.0
        %791 = vmatpush1.msra.mxu0 0.0
        %792 = vmatprep.subr.mxu0 0.0
        %793 = vmatpush1.msra.mxu0 0.0
        %794 = vmatprep.subr.mxu0 0.0
        %795 = vmatpush1.msra.mxu0 0.0
        %796 = vmatprep.subr.mxu0 0.0
        %797 = vmatpush1.msra.mxu0 0.0
        %798 = vmatprep.subr.mxu0 0.0
        %799 = vmatpush1.msra.mxu0 0.0
        %800 = vmatprep.subr.mxu0 0.0
        %801 = vmatpush1.msra.mxu0 0.0
        %802 = vmatprep.subr.mxu0 0.0
        %803 = vmatpush1.msra.mxu0 0.0
        %804 = vmatprep.subr.mxu0 0.0
        %805 = vmatpush1.msra.mxu0 0.0
        %806 = vmatprep.subr.mxu0 0.0
        %807 = vmatpush1.msra.mxu0 0.0
        %808 = vmatprep.subr.mxu0 0.0
        %809 = vmatpush1.msra.mxu0 0.0
        %810 = vmatprep.subr.mxu0 0.0
        %811 = vmatpush1.msra.mxu0 0.0
        %812 = vmatprep.subr.mxu0 0.0
        %813 = vmatpush1.msra.mxu0 0.0
        %814 = vmatprep.mubr.f32.mxu0 0.0
        %815 = vmatmul.mubr.f32.gmra.mrb[0].mxu0 %v748
        %v816 = vpop.f32.mrb[0].mxu0
        %v817 = vadd.f32 %v745, %v816
        %v818 = vpop.f32.mrb[0].mxu0
        %819 = vdwg.mxu0
        %820 = vst.msk [vmem:[%s561] sm:$0xff] %vm574, %v817
        %s821 = sand.u32 %s269, 1
        %s822 = scalar_lea.sflag [#allocation4], %s821
        %s823 = sand.u32 %s269, 1
        %s824 = smul.addr %s823, 8
        %s825 = scalar_lea.vmem [#allocation13], %s824
        %s826 = sand.u32 %s37, 1
        %s827 = scalar_lea.sflag [#allocation15], %s826
        %s828 = sand.u32 %s297, 1
        %s829 = smul.addr %s828, 8
        %s830 = scalar_lea.vmem [#allocation14], %s829
        %s831 = sand.u32 %s37, 1
        %s832 = scalar_lea.sflag [#allocation15], %s831
        %s833 = sand.u32 %s325, 1
        %s834 = smul.addr %s833, 8
        %s835 = scalar_lea.vmem [#allocation16], %s834
        // Predicated region
        $region81: #{tpu_custom_call.1} parent=55 // pred_check
          %p836 = pneg %p279
        $region82: #{tpu_custom_call.1} parent=55 // pred_check_branch
          %838 = sbr.rel (%p836) target = $region84
        $region83: #{tpu_custom_call.1} parent=55 // pred_region
          %s840 = ssub.s32 128, 128
          %841 = vsyncadd %s822, %s840
          %s842 = sadd.s32 %s42, %s41
          %s843 = smul.addr %s842, 128
          %s844 = scalar_lea.hbm %s9, %s843
          %s846 = sshll.u32 %s825, 4
          %s847 = int_to_ptr.vmem [resolvable:$true] %s846
          %849 = dma.vmem_to_hbm [thread:$0]  %s847, 128, %s844, %s822
        $region84: #{tpu_custom_call.1} parent=55 // pred_fallthru
          _
        // Predicated region
        $region85: #{tpu_custom_call.1} parent=55 // pred_check
          %p850 = pneg %p307
        $region86: #{tpu_custom_call.1} parent=55 // pred_check_branch
          %852 = sbr.rel (%p850) target = $region88
        $region87: #{tpu_custom_call.1} parent=55 // pred_region
          %s854 = ssub.s32 128, 128
          %855 = vsyncadd %s827, %s854
          %s856 = sadd.s32 %s42, %s41
          %s857 = smul.addr %s856, 128
          %s858 = scalar_lea.hbm %s10, %s857
          %s860 = sshll.u32 %s830, 4
          %s861 = int_to_ptr.vmem [resolvable:$true] %s860
          %863 = dma.vmem_to_hbm [thread:$0]  %s861, 128, %s858, %s827
        $region88: #{tpu_custom_call.1} parent=55 // pred_fallthru
          _
        // Predicated region
        $region89: #{tpu_custom_call.1} parent=55 // pred_check
          %p864 = pneg %p335
        $region90: #{tpu_custom_call.1} parent=55 // pred_check_branch
          %866 = sbr.rel (%p864) target = $region92
        $region91: #{tpu_custom_call.1} parent=55 // pred_region
          %s868 = ssub.s32 128, 128
          %869 = vsyncadd %s832, %s868
          %s870 = sadd.s32 %s42, %s41
          %s871 = smul.addr %s870, 128
          %s872 = scalar_lea.hbm %s11, %s871
          %s874 = sshll.u32 %s835, 4
          %s875 = int_to_ptr.vmem [resolvable:$true] %s874
          %877 = dma.vmem_to_hbm [thread:$0]  %s875, 128, %s872, %s832
        $region92: #{tpu_custom_call.1} parent=55 // pred_fallthru
          _
      $region56: #{tpu_custom_call.1} parent=5 // pred_fallthru
        _
      %p878 = scmp.le.s32.totalorder 2, %s32
      // Predicated region
      $region93: #{tpu_custom_call.1} parent=5 // pred_check
        %p879 = pneg %p878
      $region94: #{tpu_custom_call.1} parent=5 // pred_check_branch
        %881 = sbr.rel (%p879) target = $region96
      $region95: #{tpu_custom_call.1} parent=5 // pred_region
        %s882 = ssub.s32 %s32, 2
        // Predicated region
        $region97: #{tpu_custom_call.1} parent=95 // pred_check
          %p883 = pneg %p285
        $region98: #{tpu_custom_call.1} parent=95 // pred_check_branch
          %885 = sbr.rel (%p883) target = $region100
        $region99: #{tpu_custom_call.1} parent=95 // pred_region
          %s886 = sand.u32 %s270, 1
          %s887 = scalar_lea.sflag [#allocation4], %s886
          %s888 = sand.u32 %s270, 1
          %s889 = smul.addr %s888, 8
          %s890 = scalar_lea.vmem [#allocation13], %s889
          %891 = dma.done %s887, 128
        $region100: #{tpu_custom_call.1} parent=95 // pred_fallthru
          _
        // Predicated region
        $region101: #{tpu_custom_call.1} parent=95 // pred_check
          %p892 = pneg %p313
        $region102: #{tpu_custom_call.1} parent=95 // pred_check_branch
          %894 = sbr.rel (%p892) target = $region104
        $region103: #{tpu_custom_call.1} parent=95 // pred_region
          %s895 = sand.u32 %s38, 1
          %s896 = scalar_lea.sflag [#allocation15], %s895
          %s897 = sand.u32 %s298, 1
          %s898 = smul.addr %s897, 8
          %s899 = scalar_lea.vmem [#allocation14], %s898
          %900 = dma.done %s896, 128
        $region104: #{tpu_custom_call.1} parent=95 // pred_fallthru
          _
        // Predicated region
        $region105: #{tpu_custom_call.1} parent=95 // pred_check
          %p901 = pneg %p341
        $region106: #{tpu_custom_call.1} parent=95 // pred_check_branch
          %903 = sbr.rel (%p901) target = $region108
        $region107: #{tpu_custom_call.1} parent=95 // pred_region
          %s904 = sand.u32 %s38, 1
          %s905 = scalar_lea.sflag [#allocation15], %s904
          %s906 = sand.u32 %s326, 1
          %s907 = smul.addr %s906, 8
          %s908 = scalar_lea.vmem [#allocation16], %s907
          %909 = dma.done %s905, 128
        $region108: #{tpu_custom_call.1} parent=95 // pred_fallthru
          _
      $region96: #{tpu_custom_call.1} parent=5 // pred_fallthru
        _
    $region6: #{tpu_custom_call.1} parent=1 // loop_footer
      %s36 = sadd.s32 1, %s32
    $region7: #{tpu_custom_call.1} parent=1 // loop_footer_branch
      %31 = sbr.rel target = $region3
    $region8: #{tpu_custom_call.1} parent=1 // loop_exit
      _
    %910 = vsyncpa [#allocation3], 1
    %s911 = scalar_lea.sflag [#allocation3], 1
    %912 = vsyncpa %s911, 1
    %913 = vsyncpa [#allocation6], 1
    %s914 = scalar_lea.sflag [#allocation6], 1
    %915 = vsyncpa %s914, 1
    %916 = vsyncpa [#allocation9], 1
    %917 = vsyncpa [#allocation12], 1
    %918 = vsyncpa [#allocation4], 1
    %s919 = scalar_lea.sflag [#allocation4], 1
    %920 = vsyncpa %s919, 1
    %921 = vsyncpa [#allocation15], 1
    %s922 = scalar_lea.sflag [#allocation15], 1
    %923 = vsyncpa %s922, 1

</llo_original>
